<compile_context>
chip_gen: v7x
topology: tpu7x:2x2x1
jax: 0.10.0
libtpu: 0.0.40
codegen_flags: <defaults>
</compile_context>

<pallas_src>
import functools

import jax
import jax.numpy as jnp
from jax.experimental import pallas as pl
from jax.experimental.pallas import tpu as pltpu  # noqa: F401  (TPU backend)

D_IN = 20          # size of X = torch.rand(20)
H1 = 32            # b1 = nn.Linear(20, 32)
H2 = 16            # b2 = nn.Linear(20, 16)
H_OUT = H1 + H2    # 48 = concatenated output
K_PAD = 32         # contraction dim padded (row D_IN carries the fused bias)
N_PAD = 128        # output padded to one full lane width (lane-dense store)

_COST = pl.CostEstimate(
    flops=2 * 1 * K_PAD * N_PAD,                       # ~8 KFLOPs
    transcendentals=0,
    bytes_accessed=(1 * K_PAD + K_PAD * N_PAD + 1 * N_PAD) * 4,  # ~17 KiB
)


def n3_kernel(x_ref, w_ref, o_ref):
    # single fused (matmul + bias-via-augmented-row), one unmasked full-tile store
    o_ref[...] = jnp.dot(
        x_ref[...], w_ref[...], preferred_element_type=jnp.float32
    )


def prepare_params(w1, b1, w2, b2):
    """One-time parameter prep: fuse branches, fold bias, pad to (K_PAD, N_PAD).

    w1: (D_IN, H1), b1: (H1,), w2: (D_IN, H2), b2: (H2,)  -> w_pad: (K_PAD, N_PAD)
    Row D_IN of w_pad holds the fused bias; all other padded entries are zero.
    """
    w_fused = jnp.concatenate([w1, w2], axis=1)        # (20, 48)
    b_fused = jnp.concatenate([b1, b2], axis=0)        # (48,)
    w_pad = jnp.zeros((K_PAD, N_PAD), jnp.float32)
    w_pad = w_pad.at[:D_IN, :H_OUT].set(w_fused)
    w_pad = w_pad.at[D_IN, :H_OUT].set(b_fused)        # bias folded into row 20
    return w_pad


@functools.partial(jax.jit, donate_argnums=())
def n3_forward(x, w_pad):
    """x: (D_IN,) float32, w_pad: (K_PAD, N_PAD) -> (H_OUT,) float32
    == torch.cat((b1(X), b2(X)))"""
    # per-call work: build the tiny augmented input row [x, 1, 0...] (1, 32)
    x_pad = jnp.zeros((1, K_PAD), jnp.float32)
    x_pad = x_pad.at[0, :D_IN].set(x)
    x_pad = x_pad.at[0, D_IN].set(1.0)                 # picks up the bias row

    out = pl.pallas_call(
        n3_kernel,
        out_shape=jax.ShapeDtypeStruct((1, N_PAD), jnp.float32),
        in_specs=[
            pl.BlockSpec((1, K_PAD), lambda: (0, 0)),
            pl.BlockSpec((K_PAD, N_PAD), lambda: (0, 0)),
        ],
        out_specs=pl.BlockSpec((1, N_PAD), lambda: (0, 0)),
        cost_estimate=_COST,
    )(x_pad, w_pad)

    # strip lane padding; first H1 lanes are b1(X), next H2 are b2(X)
    return out[0, :H_OUT]


if __name__ == "__main__":
    key = jax.random.PRNGKey(0)
    kx, kw1, kb1, kw2, kb2 = jax.random.split(key, 5)

    # deterministic synthetic "module parameters" in (in, out) layout
    x = jax.random.uniform(kx, (D_IN,), dtype=jnp.float32)          # torch.rand(20)
    w1 = jax.random.normal(kw1, (D_IN, H1), dtype=jnp.float32) * 0.1
    b1 = jax.random.normal(kb1, (H1,), dtype=jnp.float32) * 0.1
    w2 = jax.random.normal(kw2, (D_IN, H2), dtype=jnp.float32) * 0.1
    b2 = jax.random.normal(kb2, (H2,), dtype=jnp.float32) * 0.1

    # one-time constant prep (hoisted out of the per-call path)
    w_pad = jax.block_until_ready(prepare_params(w1, b1, w2, b2))

    y = n3_forward(x, w_pad)
    jax.block_until_ready(y)

    # reference check in plain JAX (== torch.cat((b1(X), b2(X))))
    ref = jnp.concatenate([x @ w1 + b1, x @ w2 + b2], axis=0)
    assert y.shape == (H_OUT,)
    assert jnp.allclose(y, ref, atol=1e-5), "mismatch vs reference"

    print("KERNEL_OK")
</pallas_src>

<mosaic_0001>
module attributes {stable_mosaic.version = 11 : i64} {
  func.func @n3_kernel(%arg0: memref<1x32xf32, #tpu.memory_space<vmem>>, %arg1: memref<32x128xf32, #tpu.memory_space<vmem>>, %arg2: memref<1x128xf32, #tpu.memory_space<vmem>>) attributes {dimension_semantics = [], scalar_prefetch = 0 : i64, scratch_operands = 0 : i64, tpu.core_type = #tpu.core_type<tc>} {
    %c0 = arith.constant 0 : index
    %c0_0 = arith.constant 0 : index
    %0 = vector.load %arg0[%c0, %c0_0] : memref<1x32xf32, #tpu.memory_space<vmem>>, vector<1x32xf32>
    %c0_1 = arith.constant 0 : index
    %c0_2 = arith.constant 0 : index
    %1 = vector.load %arg1[%c0_1, %c0_2] : memref<32x128xf32, #tpu.memory_space<vmem>>, vector<32x128xf32>
    %cst = arith.constant dense<0.000000e+00> : vector<1x128xf32>
    %2 = tpu.matmul %0, %1, %cst {dimension_numbers = #tpu.dot_dimension_numbers<[1], [0], [0], [1], [0, 0, 1, 1], [], []>} : vector<1x32xf32>, vector<32x128xf32>, vector<1x128xf32> -> vector<1x128xf32>
    %c0_3 = arith.constant 0 : index
    %c0_4 = arith.constant 0 : index
    %3 = vector.load %arg2[%c0_3, %c0_4] : memref<1x128xf32, #tpu.memory_space<vmem>>, vector<1x128xf32>
    tpu.vector_store %arg2[%c0_3, %c0_4], %2 {strides = array<i32>} : memref<1x128xf32, #tpu.memory_space<vmem>>, vector<1x128xf32>,
    return
  }
}

</mosaic_0001>

<llo_original>
// kernel: n3_forward.1
$region0: #{n3_forward.1}
  #allocation0 [shape = 'u32[]', space=smem, size = 0x4, offset = 0x4, fixed_abs, tag = 'smem constant byte address 0x4 - core index']
  #allocation1 [shape = 'u32[144,128]{1,0:T(1,128)}', space=vmem, size = 0x12000, scoped, tag = 'internal scratch']
  %s0 = inlined_call_operand.vmem [shape: f32[1,32], index: 0, kind: input, shape index: {}]
  %s1 = inlined_call_operand.vmem [shape: f32[32,128], index: 1, kind: input, shape index: {}]
  %s2 = inlined_call_operand.vmem [shape: f32[1,128], index: 2, kind: output, shape index: {}]
  %s3 = sld [smem:[#allocation0]]
  $region18: #{n3_forward.1} parent=0
    _
  %s5 = ssub.s32 1, %s3
  %s6 = scalar_select 0, %s5, %s3
  // Predicated region
  $region2: #{n3_forward.1} parent=0 // pred_check
    _
  $region3: #{n3_forward.1} parent=0 // pred_check_branch
    %8 = sbr.rel (0) target = $region5
  $region4: #{n3_forward.1} parent=0 // pred_region
    _
  $region5: #{n3_forward.1} parent=0 // pred_fallthru
    _
  // Predicated region
  $region6: #{n3_forward.1} parent=0 // pred_check
    _
  $region7: #{n3_forward.1} parent=0 // pred_check_branch
    %10 = sbr.rel (0) target = $region9
  $region8: #{n3_forward.1} parent=0 // pred_region
    _
  $region9: #{n3_forward.1} parent=0 // pred_fallthru
    _
  %v11 = vld [vmem:[%s0] sm:$0x1]
  %v12 = vld [vmem:[%s1] sm:$0xff]
  %v13 = vld [vmem:[%s1 + $0x8] sm:$0xff]
  %v14 = vld [vmem:[%s1 + $0x10] sm:$0xff]
  %v15 = vld [vmem:[%s1 + $0x18] sm:$0xff]
  %vm16 = vcmask 261120
  %v18 = vsel %vm16, %v11, 0
  %20 = vmatprep.subr.mxu0 0.0
  %21 = vmatpush1.msra.mxu0 %v12
  %22 = vmatprep.subr.mxu0 0.0
  %23 = vmatpush1.msra.mxu0 %v13
  %24 = vmatprep.subr.mxu0 0.0
  %25 = vmatpush1.msra.mxu0 %v14
  %26 = vmatprep.subr.mxu0 0.0
  %27 = vmatpush1.msra.mxu0 %v15
  %28 = vmatprep.subr.mxu0 0.0
  %29 = vmatpush1.msra.mxu0 0.0
  %30 = vmatprep.subr.mxu0 0.0
  %31 = vmatpush1.msra.mxu0 0.0
  %32 = vmatprep.subr.mxu0 0.0
  %33 = vmatpush1.msra.mxu0 0.0
  %34 = vmatprep.subr.mxu0 0.0
  %35 = vmatpush1.msra.mxu0 0.0
  %36 = vmatprep.subr.mxu0 0.0
  %37 = vmatpush1.msra.mxu0 0.0
  %38 = vmatprep.subr.mxu0 0.0
  %39 = vmatpush1.msra.mxu0 0.0
  %40 = vmatprep.subr.mxu0 0.0
  %41 = vmatpush1.msra.mxu0 0.0
  %42 = vmatprep.subr.mxu0 0.0
  %43 = vmatpush1.msra.mxu0 0.0
  %44 = vmatprep.subr.mxu0 0.0
  %45 = vmatpush1.msra.mxu0 0.0
  %46 = vmatprep.subr.mxu0 0.0
  %47 = vmatpush1.msra.mxu0 0.0
  %48 = vmatprep.subr.mxu0 0.0
  %49 = vmatpush1.msra.mxu0 0.0
  %50 = vmatprep.subr.mxu0 0.0
  %51 = vmatpush1.msra.mxu0 0.0
  %52 = vmatprep.subr.mxu0 0.0
  %53 = vmatpush1.msra.mxu0 0.0
  %54 = vmatprep.subr.mxu0 0.0
  %55 = vmatpush1.msra.mxu0 0.0
  %56 = vmatprep.subr.mxu0 0.0
  %57 = vmatpush1.msra.mxu0 0.0
  %58 = vmatprep.subr.mxu0 0.0
  %59 = vmatpush1.msra.mxu0 0.0
  %60 = vmatprep.subr.mxu0 0.0
  %61 = vmatpush1.msra.mxu0 0.0
  %62 = vmatprep.subr.mxu0 0.0
  %63 = vmatpush1.msra.mxu0 0.0
  %64 = vmatprep.subr.mxu0 0.0
  %65 = vmatpush1.msra.mxu0 0.0
  %66 = vmatprep.subr.mxu0 0.0
  %67 = vmatpush1.msra.mxu0 0.0
  %68 = vmatprep.subr.mxu0 0.0
  %69 = vmatpush1.msra.mxu0 0.0
  %70 = vmatprep.subr.mxu0 0.0
  %71 = vmatpush1.msra.mxu0 0.0
  %72 = vmatprep.subr.mxu0 0.0
  %73 = vmatpush1.msra.mxu0 0.0
  %74 = vmatprep.subr.mxu0 0.0
  %75 = vmatpush1.msra.mxu0 0.0
  %76 = vmatprep.subr.mxu0 0.0
  %77 = vmatpush1.msra.mxu0 0.0
  %78 = vmatprep.subr.mxu0 0.0
  %79 = vmatpush1.msra.mxu0 0.0
  %80 = vmatprep.subr.mxu0 0.0
  %81 = vmatpush1.msra.mxu0 0.0
  %82 = vmatprep.subr.mxu0 0.0
  %83 = vmatpush1.msra.mxu0 0.0
  %84 = vmatprep.mubr.f32.mxu0 0.0
  %85 = vmatmul.mubr.f32.gmra.mrb[0].mxu0 %v18
  %v86 = vpop.f32.mrb[0].mxu0
  %v87 = vadd.f32 0.0, %v86
  %v88 = vpop.f32.mrb[0].mxu0
  %89 = vdwg.mxu0
  %90 = vst [vmem:[%s2] sm:$0x1] %v87
  // Predicated region
  $region10: #{n3_forward.1} parent=0 // pred_check
    _
  $region11: #{n3_forward.1} parent=0 // pred_check_branch
    %92 = sbr.rel (0) target = $region13
  $region12: #{n3_forward.1} parent=0 // pred_region
    _
  $region13: #{n3_forward.1} parent=0 // pred_fallthru
    _
  // Predicated region
  $region14: #{n3_forward.1} parent=0 // pred_check
    _
  $region15: #{n3_forward.1} parent=0 // pred_check_branch
    %94 = sbr.rel (0) target = $region17
  $region16: #{n3_forward.1} parent=0 // pred_region
    _
  $region17: #{n3_forward.1} parent=0 // pred_fallthru
    _

</llo_original>
